<compile_context>
chip_gen: v7x
topology: tpu7x:2x2x1
jax: 0.10.0
libtpu: 0.0.40
codegen_flags: <defaults>
</compile_context>

<pallas_src>
import jax
import jax.numpy as jnp
from jax.experimental import pallas as pl
from jax.experimental.pallas import tpu as pltpu

N_SINGLE = 4
N_DOUBLE = 1
N_FUNCS = N_SINGLE + N_DOUBLE          # 5  -> per-layer output width
OUT_DIM = N_FUNCS + N_DOUBLE           # 6  -> per-layer matmul width
DEPTH = 2                              # symbolic_depth


def _sigmoid(x):
    # Exact sigmoid: exp on the EUP + exact reciprocal.  EUP has huge slack here
    # (VALU is the binding slot), so the approx vrcp buys nothing and cost precision.
    return pl.reciprocal(1.0 + jnp.exp(-x))


def symbolic_net_kernel(x_ref, *refs):
    """refs = (W_0, ..., W_{DEPTH-1}, W_out, o_ref).

    x_ref / o_ref : (block_rows, lane) VMEM slabs (batch spread over sublanes+lanes).
    W refs        : tiny weight matrices resident in SMEM; read as scalars.
    """
    o_ref = refs[-1]
    w_refs = refs[:-1]
    hidden_w_refs = w_refs[:-1]
    out_w_ref = w_refs[-1]
    n_hidden = len(hidden_w_refs)

    # h is a Python list of per-feature slabs, each (block_rows, lane) in registers.
    h = [x_ref[...]]

    for li, w_ref in enumerate(hidden_w_refs):
        in_dim = w_ref.shape[0]
        is_last = li == n_hidden - 1

        if in_dim == 1:
            # First-layer specialisation: g_j = W[0,j] * x, hence
            #   square  = (W[0,1]^2)        * x^2
            #   product = (W[0,4] * W[0,5]) * x^2
            # with the scalar*scalar factors computed on the (idle) scalar unit.
            x = h[0]
            x2 = x * x
            w_id = w_ref[0, 0]
            w_sq = w_ref[0, 1] * w_ref[0, 1]
            w_pr = w_ref[0, 4] * w_ref[0, 5]
            if is_last:
                # Fold output weights of the linear paths (identity, product).
                w_id = w_id * out_w_ref[0, 0]
                w_pr = w_pr * out_w_ref[4, 0]
            h = [
                w_id * x,                        # identity
                w_sq * x2,                       # square
                jnp.sin(w_ref[0, 2] * x),        # sin
                _sigmoid(w_ref[0, 3] * x),       # sigmoid
                w_pr * x2,                       # product (double-input unit)
            ]
        else:
            def col(j, scale=None):
                # g_j = sum_i W[i, j] * h_i   -- scalar * vector MACs on the VPU.
                ws = [w_ref[i, j] for i in range(in_dim)]
                if scale is not None:
                    ws = [w * scale for w in ws]   # scalar-unit multiplies (free slot)
                acc = ws[0] * h[0]
                for i in range(1, in_dim):
                    acc = acc + ws[i] * h[i]
                return acc

            # Fold output weights of identity / product columns into the last layer.
            g0 = col(0, out_w_ref[0, 0] if is_last else None)
            g1 = col(1)
            g2 = col(2)
            g3 = col(3)
            g4 = col(4, out_w_ref[4, 0] if is_last else None)
            g5 = col(5)
            h = [g0, g1 * g1, jnp.sin(g2), _sigmoid(g3), g4 * g5]

    # Final reduction; identity/product output weights were already folded in above.
    out = h[0] + h[4]
    out = out + out_w_ref[1, 0] * h[1]
    out = out + out_w_ref[2, 0] * h[2]
    out = out + out_w_ref[3, 0] * h[3]
    o_ref[...] = out


def _choose_layout(B, target_block_bytes=512 * 1024):
    """Pick (lane, padded rows, block_rows) for the batch slab.

    lane = 128 keeps every block an HBM-contiguous chunk (block spans the full
    lane dim) and maximises row count for splitting.  block_rows is capped at
    ~512 KiB per buffer (safe within v5e's 16 MiB scoped VMEM with ~12 live
    per-feature slabs + double-buffered I/O) and chosen so the grid has >= 2
    steps whenever possible (both v7x TensorCores get work).
    """
    lane = 128
    rows_needed = pl.cdiv(B, lane)
    cap = max(8, (target_block_bytes // (lane * 4)) // 8 * 8)
    if rows_needed >= 16:
        half = pl.cdiv(pl.cdiv(rows_needed, 2), 8) * 8
        block_rows = min(cap, half)
    else:
        block_rows = max(8, pl.cdiv(rows_needed, 8) * 8)
    rows = pl.cdiv(rows_needed, block_rows) * block_rows
    return lane, rows, block_rows


@jax.jit
def symbolic_net_forward(x, hidden_weights, output_weight):
    """x: (B, 1) f32.  Returns (B, 1) f32.  Jitted: pad/reshape/kernel/slice fuse."""
    B = x.shape[0]
    lane, rows, block_rows = _choose_layout(B)
    Bp = rows * lane
    grid = (rows // block_rows,)

    flat = jnp.ravel(x).astype(jnp.float32)
    if Bp != B:                       # static; avoided when lane*8 | B
        flat = jnp.pad(flat, (0, Bp - B))
    x2d = flat.reshape(rows, lane)

    weights = [w.astype(jnp.float32) for w in hidden_weights] + \
              [output_weight.astype(jnp.float32)]
    n_w = len(weights)

    # Advisory cost estimate (keeps XLA from mis-scheduling this small call).
    flops = Bp * (sum(2 * int(w.shape[0]) * int(w.shape[1]) for w in hidden_weights)
                  + 4 * len(hidden_weights) + 2 * N_FUNCS)
    transcendentals = Bp * 3 * len(hidden_weights)     # sin + exp + recip per layer
    bytes_accessed = Bp * 4 * 2 + sum(int(w.size) * 4 for w in weights)

    out2d = pl.pallas_call(
        symbolic_net_kernel,
        out_shape=jax.ShapeDtypeStruct((rows, lane), jnp.float32),
        grid=grid,
        in_specs=[pl.BlockSpec((block_rows, lane), lambda i: (i, 0))]
                 + [pl.BlockSpec(memory_space=pltpu.MemorySpace.SMEM)] * n_w,
        out_specs=pl.BlockSpec((block_rows, lane), lambda i: (i, 0)),
        compiler_params=pltpu.CompilerParams(
            dimension_semantics=("parallel",),
            vmem_limit_bytes=32 * 1024 * 1024),
        cost_estimate=pl.CostEstimate(flops=flops,
                                      transcendentals=transcendentals,
                                      bytes_accessed=bytes_accessed),
    )(x2d, *weights)

    out_flat = out2d.reshape(-1)
    if Bp != B:
        out_flat = out_flat[:B]
    return out_flat.reshape(B, 1)


def reference_forward(x, hidden_weights, output_weight):
    """Pure-JAX reference matching SymbolicNet.forward semantics."""
    h = x
    for W in hidden_weights:
        g = h @ W
        h = jnp.concatenate(
            [
                g[:, 0:1],                     # identity
                g[:, 1:2] * g[:, 1:2],         # square
                jnp.sin(g[:, 2:3]),            # sin
                jax.nn.sigmoid(g[:, 3:4]),     # sigmoid
                g[:, 4:5] * g[:, 5:6],         # product
            ],
            axis=1,
        )
    return h @ output_weight


if __name__ == "__main__":
    key = jax.random.PRNGKey(0)
    k_x, k_w, k_out = jax.random.split(key, 3)

    B = 4096                                  # 32 rows x 128 lanes -> 2-step grid, no pad
    x = jax.random.normal(k_x, (B, 1), dtype=jnp.float32)

    # layer_in_dim = [1] + DEPTH * [N_FUNCS]  (as in SymbolicNet.__init__)
    layer_in_dim = [1] + DEPTH * [N_FUNCS]
    init_stddev = 0.1
    hidden_weights = []
    for i in range(DEPTH):
        k_w, sub = jax.random.split(k_w)
        hidden_weights.append(
            init_stddev * jax.random.normal(
                sub, (layer_in_dim[i], OUT_DIM), dtype=jnp.float32))
    # output_weight ~ U[0, 1) with shape (n_funcs, 1), like torch.rand
    output_weight = jax.random.uniform(k_out, (N_FUNCS, 1), dtype=jnp.float32)

    out = symbolic_net_forward(x, hidden_weights, output_weight)
    out = jax.block_until_ready(out)

    ref = reference_forward(x, hidden_weights, output_weight)
    assert out.shape == (B, 1)
    # Exact sigmoid (no approx vrcp) -> tight tolerance.
    assert jnp.allclose(out, ref, atol=1e-4, rtol=1e-4), (out[:4], ref[:4])

    print("KERNEL_OK")
</pallas_src>

<mosaic_0001>
module attributes {stable_mosaic.version = 11 : i64} {
  func.func @symbolic_net_kernel(%arg0: i32, %arg1: memref<16x128xf32, #tpu.memory_space<vmem>>, %arg2: memref<1x6xf32, #tpu.memory_space<smem>>, %arg3: memref<5x6xf32, #tpu.memory_space<smem>>, %arg4: memref<5x1xf32, #tpu.memory_space<smem>>, %arg5: memref<16x128xf32, #tpu.memory_space<vmem>>) attributes {dimension_semantics = [#tpu.dimension_semantics<parallel>], iteration_bounds = array<i64: 2>, scalar_prefetch = 0 : i64, scratch_operands = 0 : i64, tpu.core_type = #tpu.core_type<tc>, window_params = [{transform_indices = @transform_0, window_bounds = array<i64: 16, 128>}, {transform_indices = @transform_1, window_bounds = array<i64: 1, 6>}, {transform_indices = @transform_2, window_bounds = array<i64: 5, 6>}, {transform_indices = @transform_3, window_bounds = array<i64: 5, 1>}, {transform_indices = @transform_4, window_bounds = array<i64: 16, 128>}]} {
    %c0 = arith.constant 0 : index
    %c0_0 = arith.constant 0 : index
    %0 = vector.load %arg1[%c0, %c0_0] : memref<16x128xf32, #tpu.memory_space<vmem>>, vector<16x128xf32>
    %1 = arith.mulf %0, %0 : vector<16x128xf32>
    %c0_1 = arith.constant 0 : index
    %c0_2 = arith.constant 0 : index
    %2 = memref.load %arg2[%c0_1, %c0_2] : memref<1x6xf32, #tpu.memory_space<smem>>
    %c0_3 = arith.constant 0 : index
    %c1 = arith.constant 1 : index
    %3 = memref.load %arg2[%c0_3, %c1] : memref<1x6xf32, #tpu.memory_space<smem>>
    %c0_4 = arith.constant 0 : index
    %c1_5 = arith.constant 1 : index
    %4 = memref.load %arg2[%c0_4, %c1_5] : memref<1x6xf32, #tpu.memory_space<smem>>
    %5 = arith.mulf %3, %4 : f32
    %c0_6 = arith.constant 0 : index
    %c4 = arith.constant 4 : index
    %6 = memref.load %arg2[%c0_6, %c4] : memref<1x6xf32, #tpu.memory_space<smem>>
    %c0_7 = arith.constant 0 : index
    %c5 = arith.constant 5 : index
    %7 = memref.load %arg2[%c0_7, %c5] : memref<1x6xf32, #tpu.memory_space<smem>>
    %8 = arith.mulf %6, %7 : f32
    %9 = vector.broadcast %2 : f32 to vector<16x128xf32>
    %10 = arith.mulf %9, %0 : vector<16x128xf32>
    %11 = vector.broadcast %5 : f32 to vector<16x128xf32>
    %12 = arith.mulf %11, %1 : vector<16x128xf32>
    %c0_8 = arith.constant 0 : index
    %c2 = arith.constant 2 : index
    %13 = memref.load %arg2[%c0_8, %c2] : memref<1x6xf32, #tpu.memory_space<smem>>
    %14 = vector.broadcast %13 : f32 to vector<16x128xf32>
    %15 = arith.mulf %14, %0 : vector<16x128xf32>
    %16 = math.sin %15 : vector<16x128xf32>
    %c0_9 = arith.constant 0 : index
    %c3 = arith.constant 3 : index
    %17 = memref.load %arg2[%c0_9, %c3] : memref<1x6xf32, #tpu.memory_space<smem>>
    %18 = vector.broadcast %17 : f32 to vector<16x128xf32>
    %19 = arith.mulf %18, %0 : vector<16x128xf32>
    %cst = arith.constant 0.000000e+00 : f32
    %20 = vector.broadcast %cst : f32 to vector<16x128xf32>
    %21 = arith.subf %20, %19 : vector<16x128xf32>
    %22 = math.exp %21 : vector<16x128xf32>
    %cst_10 = arith.constant 1.000000e+00 : f32
    %23 = vector.broadcast %cst_10 : f32 to vector<16x128xf32>
    %24 = arith.addf %23, %22 : vector<16x128xf32>
    %25 = tpu.reciprocal %24 : vector<16x128xf32> -> vector<16x128xf32>
    %26 = vector.broadcast %8 : f32 to vector<16x128xf32>
    %27 = arith.mulf %26, %1 : vector<16x128xf32>
    %c0_11 = arith.constant 0 : index
    %c0_12 = arith.constant 0 : index
    %28 = memref.load %arg4[%c0_11, %c0_12] : memref<5x1xf32, #tpu.memory_space<smem>>
    %c0_13 = arith.constant 0 : index
    %c0_14 = arith.constant 0 : index
    %29 = memref.load %arg3[%c0_13, %c0_14] : memref<5x6xf32, #tpu.memory_space<smem>>
    %c1_15 = arith.constant 1 : index
    %c0_16 = arith.constant 0 : index
    %30 = memref.load %arg3[%c1_15, %c0_16] : memref<5x6xf32, #tpu.memory_space<smem>>
    %c2_17 = arith.constant 2 : index
    %c0_18 = arith.constant 0 : index
    %31 = memref.load %arg3[%c2_17, %c0_18] : memref<5x6xf32, #tpu.memory_space<smem>>
    %c3_19 = arith.constant 3 : index
    %c0_20 = arith.constant 0 : index
    %32 = memref.load %arg3[%c3_19, %c0_20] : memref<5x6xf32, #tpu.memory_space<smem>>
    %c4_21 = arith.constant 4 : index
    %c0_22 = arith.constant 0 : index
    %33 = memref.load %arg3[%c4_21, %c0_22] : memref<5x6xf32, #tpu.memory_space<smem>>
    %34 = arith.mulf %29, %28 : f32
    %35 = arith.mulf %30, %28 : f32
    %36 = arith.mulf %31, %28 : f32
    %37 = arith.mulf %32, %28 : f32
    %38 = arith.mulf %33, %28 : f32
    %39 = vector.broadcast %34 : f32 to vector<16x128xf32>
    %40 = arith.mulf %39, %10 : vector<16x128xf32>
    %41 = vector.broadcast %35 : f32 to vector<16x128xf32>
    %42 = arith.mulf %41, %12 : vector<16x128xf32>
    %43 = arith.addf %40, %42 : vector<16x128xf32>
    %44 = vector.broadcast %36 : f32 to vector<16x128xf32>
    %45 = arith.mulf %44, %16 : vector<16x128xf32>
    %46 = arith.addf %43, %45 : vector<16x128xf32>
    %47 = vector.broadcast %37 : f32 to vector<16x128xf32>
    %48 = arith.mulf %47, %25 : vector<16x128xf32>
    %49 = arith.addf %46, %48 : vector<16x128xf32>
    %50 = vector.broadcast %38 : f32 to vector<16x128xf32>
    %51 = arith.mulf %50, %27 : vector<16x128xf32>
    %52 = arith.addf %49, %51 : vector<16x128xf32>
    %c0_23 = arith.constant 0 : index
    %c1_24 = arith.constant 1 : index
    %53 = memref.load %arg3[%c0_23, %c1_24] : memref<5x6xf32, #tpu.memory_space<smem>>
    %c1_25 = arith.constant 1 : index
    %c1_26 = arith.constant 1 : index
    %54 = memref.load %arg3[%c1_25, %c1_26] : memref<5x6xf32, #tpu.memory_space<smem>>
    %c2_27 = arith.constant 2 : index
    %c1_28 = arith.constant 1 : index
    %55 = memref.load %arg3[%c2_27, %c1_28] : memref<5x6xf32, #tpu.memory_space<smem>>
    %c3_29 = arith.constant 3 : index
    %c1_30 = arith.constant 1 : index
    %56 = memref.load %arg3[%c3_29, %c1_30] : memref<5x6xf32, #tpu.memory_space<smem>>
    %c4_31 = arith.constant 4 : index
    %c1_32 = arith.constant 1 : index
    %57 = memref.load %arg3[%c4_31, %c1_32] : memref<5x6xf32, #tpu.memory_space<smem>>
    %58 = vector.broadcast %53 : f32 to vector<16x128xf32>
    %59 = arith.mulf %58, %10 : vector<16x128xf32>
    %60 = vector.broadcast %54 : f32 to vector<16x128xf32>
    %61 = arith.mulf %60, %12 : vector<16x128xf32>
    %62 = arith.addf %59, %61 : vector<16x128xf32>
    %63 = vector.broadcast %55 : f32 to vector<16x128xf32>
    %64 = arith.mulf %63, %16 : vector<16x128xf32>
    %65 = arith.addf %62, %64 : vector<16x128xf32>
    %66 = vector.broadcast %56 : f32 to vector<16x128xf32>
    %67 = arith.mulf %66, %25 : vector<16x128xf32>
    %68 = arith.addf %65, %67 : vector<16x128xf32>
    %69 = vector.broadcast %57 : f32 to vector<16x128xf32>
    %70 = arith.mulf %69, %27 : vector<16x128xf32>
    %71 = arith.addf %68, %70 : vector<16x128xf32>
    %c0_33 = arith.constant 0 : index
    %c2_34 = arith.constant 2 : index
    %72 = memref.load %arg3[%c0_33, %c2_34] : memref<5x6xf32, #tpu.memory_space<smem>>
    %c1_35 = arith.constant 1 : index
    %c2_36 = arith.constant 2 : index
    %73 = memref.load %arg3[%c1_35, %c2_36] : memref<5x6xf32, #tpu.memory_space<smem>>
    %c2_37 = arith.constant 2 : index
    %c2_38 = arith.constant 2 : index
    %74 = memref.load %arg3[%c2_37, %c2_38] : memref<5x6xf32, #tpu.memory_space<smem>>
    %c3_39 = arith.constant 3 : index
    %c2_40 = arith.constant 2 : index
    %75 = memref.load %arg3[%c3_39, %c2_40] : memref<5x6xf32, #tpu.memory_space<smem>>
    %c4_41 = arith.constant 4 : index
    %c2_42 = arith.constant 2 : index
    %76 = memref.load %arg3[%c4_41, %c2_42] : memref<5x6xf32, #tpu.memory_space<smem>>
    %77 = vector.broadcast %72 : f32 to vector<16x128xf32>
    %78 = arith.mulf %77, %10 : vector<16x128xf32>
    %79 = vector.broadcast %73 : f32 to vector<16x128xf32>
    %80 = arith.mulf %79, %12 : vector<16x128xf32>
    %81 = arith.addf %78, %80 : vector<16x128xf32>
    %82 = vector.broadcast %74 : f32 to vector<16x128xf32>
    %83 = arith.mulf %82, %16 : vector<16x128xf32>
    %84 = arith.addf %81, %83 : vector<16x128xf32>
    %85 = vector.broadcast %75 : f32 to vector<16x128xf32>
    %86 = arith.mulf %85, %25 : vector<16x128xf32>
    %87 = arith.addf %84, %86 : vector<16x128xf32>
    %88 = vector.broadcast %76 : f32 to vector<16x128xf32>
    %89 = arith.mulf %88, %27 : vector<16x128xf32>
    %90 = arith.addf %87, %89 : vector<16x128xf32>
    %c0_43 = arith.constant 0 : index
    %c3_44 = arith.constant 3 : index
    %91 = memref.load %arg3[%c0_43, %c3_44] : memref<5x6xf32, #tpu.memory_space<smem>>
    %c1_45 = arith.constant 1 : index
    %c3_46 = arith.constant 3 : index
    %92 = memref.load %arg3[%c1_45, %c3_46] : memref<5x6xf32, #tpu.memory_space<smem>>
    %c2_47 = arith.constant 2 : index
    %c3_48 = arith.constant 3 : index
    %93 = memref.load %arg3[%c2_47, %c3_48] : memref<5x6xf32, #tpu.memory_space<smem>>
    %c3_49 = arith.constant 3 : index
    %c3_50 = arith.constant 3 : index
    %94 = memref.load %arg3[%c3_49, %c3_50] : memref<5x6xf32, #tpu.memory_space<smem>>
    %c4_51 = arith.constant 4 : index
    %c3_52 = arith.constant 3 : index
    %95 = memref.load %arg3[%c4_51, %c3_52] : memref<5x6xf32, #tpu.memory_space<smem>>
    %96 = vector.broadcast %91 : f32 to vector<16x128xf32>
    %97 = arith.mulf %96, %10 : vector<16x128xf32>
    %98 = vector.broadcast %92 : f32 to vector<16x128xf32>
    %99 = arith.mulf %98, %12 : vector<16x128xf32>
    %100 = arith.addf %97, %99 : vector<16x128xf32>
    %101 = vector.broadcast %93 : f32 to vector<16x128xf32>
    %102 = arith.mulf %101, %16 : vector<16x128xf32>
    %103 = arith.addf %100, %102 : vector<16x128xf32>
    %104 = vector.broadcast %94 : f32 to vector<16x128xf32>
    %105 = arith.mulf %104, %25 : vector<16x128xf32>
    %106 = arith.addf %103, %105 : vector<16x128xf32>
    %107 = vector.broadcast %95 : f32 to vector<16x128xf32>
    %108 = arith.mulf %107, %27 : vector<16x128xf32>
    %109 = arith.addf %106, %108 : vector<16x128xf32>
    %c4_53 = arith.constant 4 : index
    %c0_54 = arith.constant 0 : index
    %110 = memref.load %arg4[%c4_53, %c0_54] : memref<5x1xf32, #tpu.memory_space<smem>>
    %c0_55 = arith.constant 0 : index
    %c4_56 = arith.constant 4 : index
    %111 = memref.load %arg3[%c0_55, %c4_56] : memref<5x6xf32, #tpu.memory_space<smem>>
    %c1_57 = arith.constant 1 : index
    %c4_58 = arith.constant 4 : index
    %112 = memref.load %arg3[%c1_57, %c4_58] : memref<5x6xf32, #tpu.memory_space<smem>>
    %c2_59 = arith.constant 2 : index
    %c4_60 = arith.constant 4 : index
    %113 = memref.load %arg3[%c2_59, %c4_60] : memref<5x6xf32, #tpu.memory_space<smem>>
    %c3_61 = arith.constant 3 : index
    %c4_62 = arith.constant 4 : index
    %114 = memref.load %arg3[%c3_61, %c4_62] : memref<5x6xf32, #tpu.memory_space<smem>>
    %c4_63 = arith.constant 4 : index
    %c4_64 = arith.constant 4 : index
    %115 = memref.load %arg3[%c4_63, %c4_64] : memref<5x6xf32, #tpu.memory_space<smem>>
    %116 = arith.mulf %111, %110 : f32
    %117 = arith.mulf %112, %110 : f32
    %118 = arith.mulf %113, %110 : f32
    %119 = arith.mulf %114, %110 : f32
    %120 = arith.mulf %115, %110 : f32
    %121 = vector.broadcast %116 : f32 to vector<16x128xf32>
    %122 = arith.mulf %121, %10 : vector<16x128xf32>
    %123 = vector.broadcast %117 : f32 to vector<16x128xf32>
    %124 = arith.mulf %123, %12 : vector<16x128xf32>
    %125 = arith.addf %122, %124 : vector<16x128xf32>
    %126 = vector.broadcast %118 : f32 to vector<16x128xf32>
    %127 = arith.mulf %126, %16 : vector<16x128xf32>
    %128 = arith.addf %125, %127 : vector<16x128xf32>
    %129 = vector.broadcast %119 : f32 to vector<16x128xf32>
    %130 = arith.mulf %129, %25 : vector<16x128xf32>
    %131 = arith.addf %128, %130 : vector<16x128xf32>
    %132 = vector.broadcast %120 : f32 to vector<16x128xf32>
    %133 = arith.mulf %132, %27 : vector<16x128xf32>
    %134 = arith.addf %131, %133 : vector<16x128xf32>
    %c0_65 = arith.constant 0 : index
    %c5_66 = arith.constant 5 : index
    %135 = memref.load %arg3[%c0_65, %c5_66] : memref<5x6xf32, #tpu.memory_space<smem>>
    %c1_67 = arith.constant 1 : index
    %c5_68 = arith.constant 5 : index
    %136 = memref.load %arg3[%c1_67, %c5_68] : memref<5x6xf32, #tpu.memory_space<smem>>
    %c2_69 = arith.constant 2 : index
    %c5_70 = arith.constant 5 : index
    %137 = memref.load %arg3[%c2_69, %c5_70] : memref<5x6xf32, #tpu.memory_space<smem>>
    %c3_71 = arith.constant 3 : index
    %c5_72 = arith.constant 5 : index
    %138 = memref.load %arg3[%c3_71, %c5_72] : memref<5x6xf32, #tpu.memory_space<smem>>
    %c4_73 = arith.constant 4 : index
    %c5_74 = arith.constant 5 : index
    %139 = memref.load %arg3[%c4_73, %c5_74] : memref<5x6xf32, #tpu.memory_space<smem>>
    %140 = vector.broadcast %135 : f32 to vector<16x128xf32>
    %141 = arith.mulf %140, %10 : vector<16x128xf32>
    %142 = vector.broadcast %136 : f32 to vector<16x128xf32>
    %143 = arith.mulf %142, %12 : vector<16x128xf32>
    %144 = arith.addf %141, %143 : vector<16x128xf32>
    %145 = vector.broadcast %137 : f32 to vector<16x128xf32>
    %146 = arith.mulf %145, %16 : vector<16x128xf32>
    %147 = arith.addf %144, %146 : vector<16x128xf32>
    %148 = vector.broadcast %138 : f32 to vector<16x128xf32>
    %149 = arith.mulf %148, %25 : vector<16x128xf32>
    %150 = arith.addf %147, %149 : vector<16x128xf32>
    %151 = vector.broadcast %139 : f32 to vector<16x128xf32>
    %152 = arith.mulf %151, %27 : vector<16x128xf32>
    %153 = arith.addf %150, %152 : vector<16x128xf32>
    %154 = arith.mulf %71, %71 : vector<16x128xf32>
    %155 = math.sin %90 : vector<16x128xf32>
    %cst_75 = arith.constant 0.000000e+00 : f32
    %156 = vector.broadcast %cst_75 : f32 to vector<16x128xf32>
    %157 = arith.subf %156, %109 : vector<16x128xf32>
    %158 = math.exp %157 : vector<16x128xf32>
    %cst_76 = arith.constant 1.000000e+00 : f32
    %159 = vector.broadcast %cst_76 : f32 to vector<16x128xf32>
    %160 = arith.addf %159, %158 : vector<16x128xf32>
    %161 = tpu.reciprocal %160 : vector<16x128xf32> -> vector<16x128xf32>
    %162 = arith.mulf %134, %153 : vector<16x128xf32>
    %163 = arith.addf %52, %162 : vector<16x128xf32>
    %c1_77 = arith.constant 1 : index
    %c0_78 = arith.constant 0 : index
    %164 = memref.load %arg4[%c1_77, %c0_78] : memref<5x1xf32, #tpu.memory_space<smem>>
    %165 = vector.broadcast %164 : f32 to vector<16x128xf32>
    %166 = arith.mulf %165, %154 : vector<16x128xf32>
    %167 = arith.addf %163, %166 : vector<16x128xf32>
    %c2_79 = arith.constant 2 : index
    %c0_80 = arith.constant 0 : index
    %168 = memref.load %arg4[%c2_79, %c0_80] : memref<5x1xf32, #tpu.memory_space<smem>>
    %169 = vector.broadcast %168 : f32 to vector<16x128xf32>
    %170 = arith.mulf %169, %155 : vector<16x128xf32>
    %171 = arith.addf %167, %170 : vector<16x128xf32>
    %c3_81 = arith.constant 3 : index
    %c0_82 = arith.constant 0 : index
    %172 = memref.load %arg4[%c3_81, %c0_82] : memref<5x1xf32, #tpu.memory_space<smem>>
    %173 = vector.broadcast %172 : f32 to vector<16x128xf32>
    %174 = arith.mulf %173, %161 : vector<16x128xf32>
    %175 = arith.addf %171, %174 : vector<16x128xf32>
    %c0_83 = arith.constant 0 : index
    %c0_84 = arith.constant 0 : index
    %176 = vector.load %arg5[%c0_83, %c0_84] : memref<16x128xf32, #tpu.memory_space<vmem>>, vector<16x128xf32>
    tpu.vector_store %arg5[%c0_83, %c0_84], %175 {strides = array<i32>} : memref<16x128xf32, #tpu.memory_space<vmem>>, vector<16x128xf32>,
    return
  }
  func.func @transform_0(%arg0: i32) -> (i32, i32) {
    %c0_i32 = arith.constant 0 : i32
    %c0_i32_0 = arith.constant 0 : i32
    return %arg0, %c0_i32 : i32, i32
  }
  func.func @transform_1(%arg0: i32) -> (i32, i32) {
    %c0_i32 = arith.constant 0 : i32
    %c0_i32_0 = arith.constant 0 : i32
    %c0_i32_1 = arith.constant 0 : i32
    return %c0_i32, %c0_i32_0 : i32, i32
  }
  func.func @transform_2(%arg0: i32) -> (i32, i32) {
    %c0_i32 = arith.constant 0 : i32
    %c0_i32_0 = arith.constant 0 : i32
    %c0_i32_1 = arith.constant 0 : i32
    return %c0_i32, %c0_i32_0 : i32, i32
  }
  func.func @transform_3(%arg0: i32) -> (i32, i32) {
    %c0_i32 = arith.constant 0 : i32
    %c0_i32_0 = arith.constant 0 : i32
    %c0_i32_1 = arith.constant 0 : i32
    return %c0_i32, %c0_i32_0 : i32, i32
  }
  func.func @transform_4(%arg0: i32) -> (i32, i32) {
    %c0_i32 = arith.constant 0 : i32
    %c0_i32_0 = arith.constant 0 : i32
    return %arg0, %c0_i32 : i32, i32
  }
}

</mosaic_0001>

<llo_original>
// kernel: symbolic_net_forward.1
$region0: #{symbolic_net_forward.1}
  #allocation0 [shape = 'u32[]', space=smem, size = 0x4, offset = 0x4, fixed_abs, tag = 'smem constant byte address 0x4 - core index']
  #allocation1 [shape = 'u32[144,128]{1,0:T(1,128)}', space=vmem, size = 0x12000, scoped, tag = 'internal scratch']
  %s0 = inlined_call_operand.hbm [shape: f32[32,128], index: 0, kind: input, shape index: {}]
  %s1 = inlined_call_operand.vmem [shape: f32[1,6], index: 1, kind: input, shape index: {}]
  %s2 = inlined_call_operand.vmem [shape: f32[5,6], index: 2, kind: input, shape index: {}]
  %s3 = inlined_call_operand.vmem [shape: f32[5,1], index: 3, kind: input, shape index: {}]
  %s4 = inlined_call_operand.hbm [shape: f32[32,128], index: 4, kind: output, shape index: {}]
  %s5 = sld [smem:[#allocation0]]
  $region65: #{symbolic_net_forward.1} parent=0
    _
  %s7 = ssub.s32 1, %s5
  %s8 = scalar_select 0, %s7, %s5
  $region1: #{symbolic_net_forward.1} parent=0
    #allocation2 [shape = 'u8[16384]{0}', space=vmem, size = 0x4000, scoped, tag = 'input window, operand 0']
    #allocation3 [shape = 's32[2]{0}', space=sflag, size = 0x8, scoped, tag = 'scoped memory for symbolic_net_forward.1']
    #allocation4 [shape = 's32[2]{0}', space=sflag, size = 0x8, scoped, tag = 'scoped memory for symbolic_net_forward.1']
    #allocation5 [shape = 's32[2]{0}', space=sflag, size = 0x8, scoped, tag = 'scoped memory for symbolic_net_forward.1']
    #allocation6 [shape = 'u8[512]{0}', space=smem, size = 0x200, scoped, tag = 'input window, operand 1, single buffered']
    #allocation7 [shape = 'u8[4096]{0}', space=smem, size = 0x1000, scoped, tag = 'input window, operand 2, single buffered']
    #allocation8 [shape = 's32[1]{0}', space=sflag, size = 0x4, scoped, tag = 'scoped memory for symbolic_net_forward.1']
    #allocation9 [shape = 'u8[4096]{0}', space=smem, size = 0x1000, scoped, tag = 'input window, operand 3, single buffered']
    #allocation10 [shape = 'u8[16384]{0}', space=vmem, size = 0x4000, scoped, tag = 'output window, operand 0']
    %9 = vsyncpa [#allocation3], 0
    %s10 = scalar_lea.sflag [#allocation3], 1
    %11 = vsyncpa %s10, 0
    %12 = vsyncpa [#allocation5], 0
    %13 = vsyncpa [#allocation8], 0
    %14 = vsyncpa [#allocation4], 0
    %s15 = scalar_lea.sflag [#allocation4], 1
    %16 = vsyncpa %s15, 0
    loop: start=0, step=1, limit=4
    $region2: #{symbolic_net_forward.1} parent=1 // loop_pre_header
      _
    $region3: #{symbolic_net_forward.1} parent=1 // loop_header
      %s18 = sphi 0, %s22
      %p19 = scmp.ge.s32.totalorder %s18, 4
      %s28 = sphi 0, %s30
      %s31 = sphi 0, %s28
      %s32 = sphi 0, %s31
      %s48 = sphi 0, %s32
      %s52 = sphi 0, %s52
      %s54 = sphi 0, %s52
      %s55 = sphi 0, %s54
      %s69 = sphi 0, %s55
      %s73 = sphi 0, %s73
      %s75 = sphi 0, %s73
      %s76 = sphi 0, %s75
      %s90 = sphi 0, %s76
      %s94 = sphi 0, %s94
      %s96 = sphi 0, %s94
      %s97 = sphi 0, %s96
      %s111 = sphi 0, %s97
      %s117 = sphi 0, %s119
      %s120 = sphi 0, %s117
      %s121 = sphi 0, %s120
      %s137 = sphi 0, %s121
    $region4: #{symbolic_net_forward.1} parent=1 // loop_header_branch
      %21 = sbr.rel (%p19) target = $region8
    $region5: #{symbolic_net_forward.1} parent=1 // loop_body
      %s23 = ssub.s32 %s18, 1
      %s24 = ssub.s32 %s18, 2
      %s25 = sadd.s32 %s18, 1
      %s26 = ssub.s32 %s18, %s25
      %p27 = scmp.eq.s32.totalorder %s26, 0
      %s29 = sadd.s32 %s28, 1
      %s30 = scalar_select %p27, %s28, %s29
      %p33 = pneg %p27
      %p34 = scmp.eq.s32.totalorder %s18, 1
      %p35 = por %p33, %p34
      %p36 = scmp.ne.s32.totalorder %s28, %s31
      %p37 = scmp.eq.s32.totalorder %s18, 0
      %p38 = por %p36, %p37
      %p39 = scmp.ne.s32.totalorder %s28, %s31
      %p40 = scmp.eq.s32.totalorder %s23, 1
      %p41 = por %p39, %p40
      %p42 = scmp.ne.s32.totalorder %s31, %s32
      %p43 = scmp.eq.s32.totalorder %s23, 0
      %p44 = por %p42, %p43
      %p45 = scmp.ne.s32.totalorder %s31, %s32
      %p46 = scmp.eq.s32.totalorder %s24, 1
      %p47 = por %p45, %p46
      %p49 = scmp.ne.s32.totalorder %s32, %s48
      %p50 = scmp.eq.s32.totalorder %s24, 0
      %p51 = por %p49, %p50
      %s53 = sadd.s32 %s52, 1
      %p56 = scmp.eq.s32.totalorder %s18, 1
      %p57 = scmp.ne.s32.totalorder %s52, %s54
      %p58 = scmp.eq.s32.totalorder %s18, 0
      %p59 = por %p57, %p58
      %p60 = scmp.ne.s32.totalorder %s52, %s54
      %p61 = scmp.eq.s32.totalorder %s23, 1
      %p62 = por %p60, %p61
      %p63 = scmp.ne.s32.totalorder %s54, %s55
      %p64 = scmp.eq.s32.totalorder %s23, 0
      %p65 = por %p63, %p64
      %p66 = scmp.ne.s32.totalorder %s54, %s55
      %p67 = scmp.eq.s32.totalorder %s24, 1
      %p68 = por %p66, %p67
      %p70 = scmp.ne.s32.totalorder %s55, %s69
      %p71 = scmp.eq.s32.totalorder %s24, 0
      %p72 = por %p70, %p71
      %s74 = sadd.s32 %s73, 1
      %p77 = scmp.eq.s32.totalorder %s18, 1
      %p78 = scmp.ne.s32.totalorder %s73, %s75
      %p79 = scmp.eq.s32.totalorder %s18, 0
      %p80 = por %p78, %p79
      %p81 = scmp.ne.s32.totalorder %s73, %s75
      %p82 = scmp.eq.s32.totalorder %s23, 1
      %p83 = por %p81, %p82
      %p84 = scmp.ne.s32.totalorder %s75, %s76
      %p85 = scmp.eq.s32.totalorder %s23, 0
      %p86 = por %p84, %p85
      %p87 = scmp.ne.s32.totalorder %s75, %s76
      %p88 = scmp.eq.s32.totalorder %s24, 1
      %p89 = por %p87, %p88
      %p91 = scmp.ne.s32.totalorder %s76, %s90
      %p92 = scmp.eq.s32.totalorder %s24, 0
      %p93 = por %p91, %p92
      %s95 = sadd.s32 %s94, 1
      %p98 = scmp.eq.s32.totalorder %s18, 1
      %p99 = scmp.ne.s32.totalorder %s94, %s96
      %p100 = scmp.eq.s32.totalorder %s18, 0
      %p101 = por %p99, %p100
      %p102 = scmp.ne.s32.totalorder %s94, %s96
      %p103 = scmp.eq.s32.totalorder %s23, 1
      %p104 = por %p102, %p103
      %p105 = scmp.ne.s32.totalorder %s96, %s97
      %p106 = scmp.eq.s32.totalorder %s23, 0
      %p107 = por %p105, %p106
      %p108 = scmp.ne.s32.totalorder %s96, %s97
      %p109 = scmp.eq.s32.totalorder %s24, 1
      %p110 = por %p108, %p109
      %p112 = scmp.ne.s32.totalorder %s97, %s111
      %p113 = scmp.eq.s32.totalorder %s24, 0
      %p114 = por %p112, %p113
      %s115 = ssub.s32 %s18, %s25
      %p116 = scmp.eq.s32.totalorder %s115, 0
      %s118 = sadd.s32 %s117, 1
      %s119 = scalar_select %p116, %s117, %s118
      %p122 = pneg %p116
      %p123 = scmp.eq.s32.totalorder %s18, 1
      %p124 = por %p122, %p123
      %p125 = scmp.ne.s32.totalorder %s117, %s120
      %p126 = scmp.eq.s32.totalorder %s18, 0
      %p127 = por %p125, %p126
      %p128 = scmp.ne.s32.totalorder %s117, %s120
      %p129 = scmp.eq.s32.totalorder %s23, 1
      %p130 = por %p128, %p129
      %p131 = scmp.ne.s32.totalorder %s120, %s121
      %p132 = scmp.eq.s32.totalorder %s23, 0
      %p133 = por %p131, %p132
      %p134 = scmp.ne.s32.totalorder %s120, %s121
      %p135 = scmp.eq.s32.totalorder %s24, 1
      %p136 = por %p134, %p135
      %p138 = scmp.ne.s32.totalorder %s121, %s137
      %p139 = scmp.eq.s32.totalorder %s24, 0
      %p140 = por %p138, %p139
      %p141 = scmp.le.s32.totalorder 1, %s18
      %p142 = scmp.lt.s32.totalorder %s18, 3
      %p143 = pnand %p141, %p142
      %p144 = pneg %p143
      // Predicated region
      $region9: #{symbolic_net_forward.1} parent=5 // pred_check
        _
      $region10: #{symbolic_net_forward.1} parent=5 // pred_check_branch
        %146 = sbr.rel (%p143) target = $region12
      $region11: #{symbolic_net_forward.1} parent=5 // pred_region
        %s147 = ssub.s32 %s18, 1
        // Predicated region
        $region13: #{symbolic_net_forward.1} parent=11 // pred_check
          %p148 = pneg %p65
        $region14: #{symbolic_net_forward.1} parent=11 // pred_check_branch
          %150 = sbr.rel (%p148) target = $region16
        $region15: #{symbolic_net_forward.1} parent=11 // pred_region
          %s152 = ssub.s32 16, 16
          %153 = vsyncadd [#allocation5], %s152
          %s155 = sshll.u32 %s1, 4
          %s156 = int_to_ptr.vmem [resolvable:$true] %s155
          %158 = dma.vmem_to_smem %s156, 16, [#allocation6], [#allocation5]
        $region16: #{symbolic_net_forward.1} parent=11 // pred_fallthru
          _
        // Predicated region
        $region17: #{symbolic_net_forward.1} parent=11 // pred_check
          %p159 = pneg %p86
        $region18: #{symbolic_net_forward.1} parent=11 // pred_check_branch
          %161 = sbr.rel (%p159) target = $region20
        $region19: #{symbolic_net_forward.1} parent=11 // pred_region
          %s163 = ssub.s32 128, 128
          %164 = vsyncadd [#allocation8], %s163
          %s166 = sshll.u32 %s2, 4
          %s167 = int_to_ptr.vmem [resolvable:$true] %s166
          %169 = dma.vmem_to_smem %s167, 128, [#allocation7], [#allocation8]
        $region20: #{symbolic_net_forward.1} parent=11 // pred_fallthru
          _
        // Predicated region
        $region21: #{symbolic_net_forward.1} parent=11 // pred_check
          %p170 = pneg %p107
        $region22: #{symbolic_net_forward.1} parent=11 // pred_check_branch
          %172 = sbr.rel (%p170) target = $region24
        $region23: #{symbolic_net_forward.1} parent=11 // pred_region
          %s174 = ssub.s32 128, 128
          %175 = vsyncadd [#allocation8], %s174
          %s177 = sshll.u32 %s3, 4
          %s178 = int_to_ptr.vmem [resolvable:$true] %s177
          %180 = dma.vmem_to_smem %s178, 128, [#allocation9], [#allocation8]
        $region24: #{symbolic_net_forward.1} parent=11 // pred_fallthru
          _
      $region12: #{symbolic_net_forward.1} parent=5 // pred_fallthru
        _
      %p181 = scmp.lt.s32.totalorder %s18, 2
      // Predicated region
      $region25: #{symbolic_net_forward.1} parent=5 // pred_check
        %p182 = pneg %p181
      $region26: #{symbolic_net_forward.1} parent=5 // pred_check_branch
        %184 = sbr.rel (%p182) target = $region28
      $region27: #{symbolic_net_forward.1} parent=5 // pred_region
        // Predicated region
        $region29: #{symbolic_net_forward.1} parent=27 // pred_check
          %p185 = pneg %p38
        $region30: #{symbolic_net_forward.1} parent=27 // pred_check_branch
          %187 = sbr.rel (%p185) target = $region32
        $region31: #{symbolic_net_forward.1} parent=27 // pred_region
          %s188 = sand.u32 %s28, 1
          %s189 = scalar_lea.sflag [#allocation3], %s188
          %s190 = sand.u32 %s28, 1
          %s191 = smul.addr %s190, 16
          %s192 = scalar_lea.vmem [#allocation2], %s191
          %s193 = smul.u32 2, %s18
          %s195 = ssub.s32 256, 256
          %196 = vsyncadd %s189, %s195
          %s197 = smul.addr %s193, 128
          %s198 = scalar_lea.hbm %s0, %s197
          %s199 = sshll.u32 %s192, 4
          %s200 = int_to_ptr.vmem [resolvable:$true] %s199
          %205 = dma.hbm_to_vmem [thread:$0]  %s198, 256, %s200, %s189, 128, 128, 8
        $region32: #{symbolic_net_forward.1} parent=27 // pred_fallthru
          _
      $region28: #{symbolic_net_forward.1} parent=5 // pred_fallthru
        _
      %p206 = scmp.le.s32.totalorder 1, %s18
      %p207 = scmp.lt.s32.totalorder %s18, 3
      %p208 = pnand %p206, %p207
      %p209 = pneg %p208
      // Predicated region
      $region33: #{symbolic_net_forward.1} parent=5 // pred_check
        _
      $region34: #{symbolic_net_forward.1} parent=5 // pred_check_branch
        %211 = sbr.rel (%p208) target = $region36
      $region35: #{symbolic_net_forward.1} parent=5 // pred_region
        %s212 = ssub.s32 %s18, 1
        %s213 = sand.u32 %s31, 1
        %s214 = scalar_lea.sflag [#allocation3], %s213
        %s215 = sand.u32 %s31, 1
        %s216 = smul.addr %s215, 16
        %s217 = scalar_lea.vmem [#allocation2], %s216
        // Predicated region
        $region37: #{symbolic_net_forward.1} parent=35 // pred_check
          %p218 = pneg %p44
        $region38: #{symbolic_net_forward.1} parent=35 // pred_check_branch
          %220 = sbr.rel (%p218) target = $region40
        $region39: #{symbolic_net_forward.1} parent=35 // pred_region
          %221 = dma.done %s214, 256
        $region40: #{symbolic_net_forward.1} parent=35 // pred_fallthru
          _
        // Predicated region
        $region41: #{symbolic_net_forward.1} parent=35 // pred_check
          %p222 = pneg %p65
        $region42: #{symbolic_net_forward.1} parent=35 // pred_check_branch
          %224 = sbr.rel (%p222) target = $region44
        $region43: #{symbolic_net_forward.1} parent=35 // pred_region
          %225 = dma.done [#allocation5], 16
        $region44: #{symbolic_net_forward.1} parent=35 // pred_fallthru
          _
        // Predicated region
        $region45: #{symbolic_net_forward.1} parent=35 // pred_check
          %p226 = pneg %p86
        $region46: #{symbolic_net_forward.1} parent=35 // pred_check_branch
          %228 = sbr.rel (%p226) target = $region48
        $region47: #{symbolic_net_forward.1} parent=35 // pred_region
          %229 = dma.done [#allocation8], 128
        $region48: #{symbolic_net_forward.1} parent=35 // pred_fallthru
          _
        // Predicated region
        $region49: #{symbolic_net_forward.1} parent=35 // pred_check
          %p230 = pneg %p107
        $region50: #{symbolic_net_forward.1} parent=35 // pred_check_branch
          %232 = sbr.rel (%p230) target = $region52
        $region51: #{symbolic_net_forward.1} parent=35 // pred_region
          %233 = dma.done [#allocation8], 128
        $region52: #{symbolic_net_forward.1} parent=35 // pred_fallthru
          _
        %234 = sfence
        %s235 = sand.u32 %s31, 1
        %s236 = scalar_lea.sflag [#allocation3], %s235
        %s237 = sand.u32 %s31, 1
        %s238 = smul.addr %s237, 16
        %s239 = scalar_lea.vmem [#allocation2], %s238
        %p240 = pneg %p44
        %p241 = pneg %p41
        %p242 = pneg %p65
        %p243 = pneg %p62
        %p244 = pneg %p86
        %p245 = pneg %p83
        %p246 = pneg %p107
        %p247 = pneg %p104
        %p248 = pneg %p133
        %p249 = pneg %p130
        %s250 = sand.u32 %s120, 1
        %s251 = scalar_lea.sflag [#allocation4], %s250
        %s252 = sand.u32 %s120, 1
        %s253 = smul.addr %s252, 16
        %s254 = scalar_lea.vmem [#allocation10], %s253
        %s255 = smul.u32 2, %s23
        %s256 = smul.u32 2, %s23
        %v257 = vld [vmem:[%s217] sm:$0xff]
        %v258 = vld [vmem:[%s217 + $0x8] sm:$0xff]
        %v259 = vmul.f32 %v257, %v257
        %v260 = vmul.f32 %v258, %v258
        %s261 = sld [smem:[#allocation6]]
        %s262 = sld [smem:[#allocation6 + $0x1]]
        %s263 = smul.f32 %s262, %s262
        %s264 = sld [smem:[#allocation6 + $0x4]]
        %s265 = sld [smem:[#allocation6 + $0x5]]
        %s266 = smul.f32 %s264, %s265
        %v267 = vstv %s261
        %v268 = vmul.f32 %v267, %v257
        %v269 = vmul.f32 %v267, %v258
        %v270 = vstv %s263
        %v271 = vmul.f32 %v270, %v259
        %v272 = vmul.f32 %v270, %v260
        %s273 = sld [smem:[#allocation6 + $0x2]]
        %v274 = vstv %s273
        %v275 = vmul.f32 %v274, %v257
        %v276 = vmul.f32 %v274, %v258
        %v277 = vand.u32 2147483647, %v275
        %vm278 = vcmp.le.f32.partialorder %v277, 0.7853982
        %vm279 = vcmp.lt.s32.totalorder %v275, 0
        %v280 = vand.u32 %v275, 2139095040
        %v281 = vshrl.u32 %v280, 23
        %v282 = vsub.s32 %v281, 127
        %v283 = vand.u32 2147483647, %v275
        %v284 = vand.u32 %v283, 8388607
        %v285 = vor.u32 %v284, 8388608
        %v286 = vsub.s32 0, %v285
        %v287 = vadd.s32 %v282, 1
        %vm288 = vcmp.gt.s32.totalorder %v287, 0
        %v289 = vsel %vm288, %v287, 0
        %v290 = vshrl.u32 %v289, 5
        %v291 = vand.u32 %v289, 31
        %v292 = vsub.s32 32, %v291
        %v293 = vshrl.u32 683565275, %v292
        %v294 = vshll.u32 683565275, %v291
        %v295 = vshrl.u32 2475754826, %v292
        %v296 = vor.u32 %v294, %v295
        %v297 = vshll.u32 2475754826, %v291
        %v298 = vshrl.u32 2131351028, %v292
        %v299 = vor.u32 %v297, %v298
        %v300 = vshll.u32 2131351028, %v291
        %v301 = vshrl.u32 2102212464, %v292
        %v302 = vor.u32 %v300, %v301
        %v303 = vshll.u32 2102212464, %v291
        %v304 = vshrl.u32 920167782, %v292
        %v305 = vor.u32 %v303, %v304
        %v306 = vshll.u32 920167782, %v291
        %v307 = vshrl.u32 1326507024, %v292
        %v308 = vor.u32 %v306, %v307
        %vm309 = vcmp.lt.s32.totalorder %v290, 1
        %vm310 = vcmp.lt.s32.totalorder %v290, 2
        %vm311 = vcmp.lt.s32.totalorder %v290, 3
        %vm312 = vcmp.lt.s32.totalorder %v290, 4
        %v313 = vsel %vm309, %v293, %v296
        %v314 = vsel %vm312, %v302, 2102212464
        %v315 = vsel %vm311, %v299, %v314
        %v316 = vsel %vm310, %v313, %v315
        %v317 = vsel %vm309, %v296, %v299
        %v318 = vsel %vm312, %v305, 920167782
        %v319 = vsel %vm311, %v302, %v318
        %v320 = vsel %vm310, %v317, %v319
        %v321 = vsel %vm309, %v299, %v302
        %v322 = vsel %vm312, %v308, 1326507024
        %v323 = vsel %vm311, %v305, %v322
        %v324 = vsel %vm310, %v321, %v323
        %v325 = vshll.u32 %v285, 8
        %v326 = vmul.u32.u64.compose %v325, %v324
        %v327 = vextract.low.u32 %v326
        %v328 = vextract.high.u32 %v326
        %v329 = vmul.u32.u64.compose %v325, %v320
        %v330 = vextract.low.u32 %v329
        %v331 = vextract.high.u32 %v329
        %v332 = vmul.u32 %v325, %v316
        %v333 = vadd.s32 %v328, %v330
        %vm334 = vc.u32 %v328, %v330
        %v335 = vadd.s32 %v331, 1
        %v336 = vsel %vm334, %v335, %v331
        %v337 = vadd.s32 %v332, %v336
        %v338 = vadd.s32 %v337, 536870912
        %v339 = vshrl.u32 %v338, 30
        %v340 = vshll.u32 %v339, 30
        %v341 = vsub.s32 %v337, %v340
        %vm342 = vcmp.lt.s32.totalorder %v341, 0
        %v343 = vsub.s32 0, %v341
        %v344 = vsel %vm342, %v343, %v341
        %v345 = vclz %v344
        %v346 = vsub.s32 %v345, 2
        %vm347 = vcmp.gt.s32.totalorder 0, %v346
        %v348 = vsel %vm347, 0, %v346
        %v349 = vsub.s32 32, %v348
        %v350 = vshll.u32 %v341, %v348
        %v351 = vshrl.u32 %v333, %v349
        %v352 = vor.u32 %v350, %v351
        %v353 = vsub.s32 4294967266, %v348
        %v354 = vadd.s32 %v353, 127
        %v355 = vshll.u32 %v354, 23
        %v356 = vor.u32 4788187, %v355
        %v357 = vand.u32 2147483647, %v356
        %v359 = vcvt.s32.f32 %v352
        %v360 = vmul.f32 %v359, %v357
        %v361 = vxor.u32 %v360, 2147483648
        %v362 = vsel %vm279, %v361, %v360
        %v363 = vsub.s32 4, %v339
        %v364 = vsel %vm279, %v363, %v339
        %v365 = vsel %vm278, %v275, %v362
        %v366 = vsel %vm278, 0, %v364
        %v367 = vcosq.f32.pop %v365
        %v368 = vsinq.f32.pop %v365
        %vm369 = vweird.f32 %v275
        %v370 = vadd.s32 %v366, 3
        %v371 = vand.u32 %v370, 3
        %vm372 = vcmp.lt.s32.totalorder %v371, 2
        %vm373 = vcmp.eq.s32.totalorder %v371, 0
        %v374 = vxor.u32 %v368, 2147483648
        %v375 = vsel %vm373, %v367, %v374
        %vm376 = vcmp.eq.s32.totalorder %v371, 2
        %v377 = vxor.u32 %v367, 2147483648
        %v378 = vsel %vm376, %v377, %v368
        %v379 = vsel %vm372, %v375, %v378
        %v380 = vsel %vm369, nan, %v379
        %v381 = vand.u32 2147483647, %v276
        %vm382 = vcmp.le.f32.partialorder %v381, 0.7853982
        %vm383 = vcmp.lt.s32.totalorder %v276, 0
        %v384 = vand.u32 %v276, 2139095040
        %v385 = vshrl.u32 %v384, 23
        %v386 = vsub.s32 %v385, 127
        %v387 = vand.u32 2147483647, %v276
        %v388 = vand.u32 %v387, 8388607
        %v389 = vor.u32 %v388, 8388608
        %v390 = vsub.s32 0, %v389
        %v391 = vadd.s32 %v386, 1
        %vm392 = vcmp.gt.s32.totalorder %v391, 0
        %v393 = vsel %vm392, %v391, 0
        %v394 = vshrl.u32 %v393, 5
        %v395 = vand.u32 %v393, 31
        %v396 = vsub.s32 32, %v395
        %v397 = vshrl.u32 683565275, %v396
        %v398 = vshll.u32 683565275, %v395
        %v399 = vshrl.u32 2475754826, %v396
        %v400 = vor.u32 %v398, %v399
        %v401 = vshll.u32 2475754826, %v395
        %v402 = vshrl.u32 2131351028, %v396
        %v403 = vor.u32 %v401, %v402
        %v404 = vshll.u32 2131351028, %v395
        %v405 = vshrl.u32 2102212464, %v396
        %v406 = vor.u32 %v404, %v405
        %v407 = vshll.u32 2102212464, %v395
        %v408 = vshrl.u32 920167782, %v396
        %v409 = vor.u32 %v407, %v408
        %v410 = vshll.u32 920167782, %v395
        %v411 = vshrl.u32 1326507024, %v396
        %v412 = vor.u32 %v410, %v411
        %vm413 = vcmp.lt.s32.totalorder %v394, 1
        %vm414 = vcmp.lt.s32.totalorder %v394, 2
        %vm415 = vcmp.lt.s32.totalorder %v394, 3
        %vm416 = vcmp.lt.s32.totalorder %v394, 4
        %v417 = vsel %vm413, %v397, %v400
        %v418 = vsel %vm416, %v406, 2102212464
        %v419 = vsel %vm415, %v403, %v418
        %v420 = vsel %vm414, %v417, %v419
        %v421 = vsel %vm413, %v400, %v403
        %v422 = vsel %vm416, %v409, 920167782
        %v423 = vsel %vm415, %v406, %v422
        %v424 = vsel %vm414, %v421, %v423
        %v425 = vsel %vm413, %v403, %v406
        %v426 = vsel %vm416, %v412, 1326507024
        %v427 = vsel %vm415, %v409, %v426
        %v428 = vsel %vm414, %v425, %v427
        %v429 = vshll.u32 %v389, 8
        %v430 = vmul.u32.u64.compose %v429, %v428
        %v431 = vextract.low.u32 %v430
        %v432 = vextract.high.u32 %v430
        %v433 = vmul.u32.u64.compose %v429, %v424
        %v434 = vextract.low.u32 %v433
        %v435 = vextract.high.u32 %v433
        %v436 = vmul.u32 %v429, %v420
        %v437 = vadd.s32 %v432, %v434
        %vm438 = vc.u32 %v432, %v434
        %v439 = vadd.s32 %v435, 1
        %v440 = vsel %vm438, %v439, %v435
        %v441 = vadd.s32 %v436, %v440
        %v442 = vadd.s32 %v441, 536870912
        %v443 = vshrl.u32 %v442, 30
        %v444 = vshll.u32 %v443, 30
        %v445 = vsub.s32 %v441, %v444
        %vm446 = vcmp.lt.s32.totalorder %v445, 0
        %v447 = vsub.s32 0, %v445
        %v448 = vsel %vm446, %v447, %v445
        %v449 = vclz %v448
        %v450 = vsub.s32 %v449, 2
        %vm451 = vcmp.gt.s32.totalorder 0, %v450
        %v452 = vsel %vm451, 0, %v450
        %v453 = vsub.s32 32, %v452
        %v454 = vshll.u32 %v445, %v452
        %v455 = vshrl.u32 %v437, %v453
        %v456 = vor.u32 %v454, %v455
        %v457 = vsub.s32 4294967266, %v452
        %v458 = vadd.s32 %v457, 127
        %v459 = vshll.u32 %v458, 23
        %v460 = vor.u32 4788187, %v459
        %v461 = vand.u32 2147483647, %v460
        %v463 = vcvt.s32.f32 %v456
        %v464 = vmul.f32 %v463, %v461
        %v465 = vxor.u32 %v464, 2147483648
        %v466 = vsel %vm383, %v465, %v464
        %v467 = vsub.s32 4, %v443
        %v468 = vsel %vm383, %v467, %v443
        %v469 = vsel %vm382, %v276, %v466
        %v470 = vsel %vm382, 0, %v468
        %v471 = vcosq.f32.pop %v469
        %v472 = vsinq.f32.pop %v469
        %vm473 = vweird.f32 %v276
        %v474 = vadd.s32 %v470, 3
        %v475 = vand.u32 %v474, 3
        %vm476 = vcmp.lt.s32.totalorder %v475, 2
        %vm477 = vcmp.eq.s32.totalorder %v475, 0
        %v478 = vxor.u32 %v472, 2147483648
        %v479 = vsel %vm477, %v471, %v478
        %vm480 = vcmp.eq.s32.totalorder %v475, 2
        %v481 = vxor.u32 %v471, 2147483648
        %v482 = vsel %vm480, %v481, %v472
        %v483 = vsel %vm476, %v479, %v482
        %v484 = vsel %vm473, nan, %v483
        %s485 = sld [smem:[#allocation6 + $0x3]]
        %v486 = vstv %s485
        %v487 = vmul.f32 %v486, %v257
        %v488 = vmul.f32 %v486, %v258
        %v489 = vsub.f32 0.0, %v487
        %v490 = vsub.f32 0.0, %v488
        %v491 = vmul.f32 %v489, 1.442695
        %v492 = vpow.pop %v491
        %v493 = vmul.f32 %v490, 1.442695
        %v494 = vpow.pop %v493
        %v495 = vadd.f32 %v492, 1.0
        %v496 = vadd.f32 %v494, 1.0
        %v497 = vrcp.pop %v495
        %v498 = vrcp.pop %v496
        %v499 = vstv %s266
        %v500 = vmul.f32 %v499, %v259
        %v501 = vmul.f32 %v499, %v260
        %s502 = sld [smem:[#allocation9]]
        %s503 = sld [smem:[#allocation7]]
        %s504 = sld [smem:[#allocation7 + $0x80]]
        %s505 = sld [smem:[#allocation7 + $0x100]]
        %s506 = sld [smem:[#allocation7 + $0x180]]
        %s507 = sld [smem:[#allocation7 + $0x200]]
        %s508 = smul.f32 %s503, %s502
        %s509 = smul.f32 %s504, %s502
        %s510 = smul.f32 %s505, %s502
        %s511 = smul.f32 %s506, %s502
        %s512 = smul.f32 %s507, %s502
        %v513 = vstv %s508
        %v514 = vmul.f32 %v513, %v268
        %v515 = vmul.f32 %v513, %v269
        %v516 = vstv %s509
        %v517 = vmul.f32 %v516, %v271
        %v518 = vmul.f32 %v516, %v272
        %v519 = vadd.f32 %v514, %v517
        %v520 = vadd.f32 %v515, %v518
        %v521 = vstv %s510
        %v522 = vmul.f32 %v521, %v380
        %v523 = vmul.f32 %v521, %v484
        %v524 = vadd.f32 %v519, %v522
        %v525 = vadd.f32 %v520, %v523
        %v526 = vstv %s511
        %v527 = vmul.f32 %v526, %v497
        %v528 = vmul.f32 %v526, %v498
        %v529 = vadd.f32 %v524, %v527
        %v530 = vadd.f32 %v525, %v528
        %v531 = vstv %s512
        %v532 = vmul.f32 %v531, %v500
        %v533 = vmul.f32 %v531, %v501
        %v534 = vadd.f32 %v529, %v532
        %v535 = vadd.f32 %v530, %v533
        %s536 = sld [smem:[#allocation7 + $0x1]]
        %s537 = sld [smem:[#allocation7 + $0x81]]
        %s538 = sld [smem:[#allocation7 + $0x101]]
        %s539 = sld [smem:[#allocation7 + $0x181]]
        %s540 = sld [smem:[#allocation7 + $0x201]]
        %v541 = vstv %s536
        %v542 = vmul.f32 %v541, %v268
        %v543 = vmul.f32 %v541, %v269
        %v544 = vstv %s537
        %v545 = vmul.f32 %v544, %v271
        %v546 = vmul.f32 %v544, %v272
        %v547 = vadd.f32 %v542, %v545
        %v548 = vadd.f32 %v543, %v546
        %v549 = vstv %s538
        %v550 = vmul.f32 %v549, %v380
        %v551 = vmul.f32 %v549, %v484
        %v552 = vadd.f32 %v547, %v550
        %v553 = vadd.f32 %v548, %v551
        %v554 = vstv %s539
        %v555 = vmul.f32 %v554, %v497
        %v556 = vmul.f32 %v554, %v498
        %v557 = vadd.f32 %v552, %v555
        %v558 = vadd.f32 %v553, %v556
        %v559 = vstv %s540
        %v560 = vmul.f32 %v559, %v500
        %v561 = vmul.f32 %v559, %v501
        %v562 = vadd.f32 %v557, %v560
        %v563 = vadd.f32 %v558, %v561
        %s564 = sld [smem:[#allocation7 + $0x2]]
        %s565 = sld [smem:[#allocation7 + $0x82]]
        %s566 = sld [smem:[#allocation7 + $0x102]]
        %s567 = sld [smem:[#allocation7 + $0x182]]
        %s568 = sld [smem:[#allocation7 + $0x202]]
        %v569 = vstv %s564
        %v570 = vmul.f32 %v569, %v268
        %v571 = vmul.f32 %v569, %v269
        %v572 = vstv %s565
        %v573 = vmul.f32 %v572, %v271
        %v574 = vmul.f32 %v572, %v272
        %v575 = vadd.f32 %v570, %v573
        %v576 = vadd.f32 %v571, %v574
        %v577 = vstv %s566
        %v578 = vmul.f32 %v577, %v380
        %v579 = vmul.f32 %v577, %v484
        %v580 = vadd.f32 %v575, %v578
        %v581 = vadd.f32 %v576, %v579
        %v582 = vstv %s567
        %v583 = vmul.f32 %v582, %v497
        %v584 = vmul.f32 %v582, %v498
        %v585 = vadd.f32 %v580, %v583
        %v586 = vadd.f32 %v581, %v584
        %v587 = vstv %s568
        %v588 = vmul.f32 %v587, %v500
        %v589 = vmul.f32 %v587, %v501
        %v590 = vadd.f32 %v585, %v588
        %v591 = vadd.f32 %v586, %v589
        %s592 = sld [smem:[#allocation7 + $0x3]]
        %s593 = sld [smem:[#allocation7 + $0x83]]
        %s594 = sld [smem:[#allocation7 + $0x103]]
        %s595 = sld [smem:[#allocation7 + $0x183]]
        %s596 = sld [smem:[#allocation7 + $0x203]]
        %v597 = vstv %s592
        %v598 = vmul.f32 %v597, %v268
        %v599 = vmul.f32 %v597, %v269
        %v600 = vstv %s593
        %v601 = vmul.f32 %v600, %v271
        %v602 = vmul.f32 %v600, %v272
        %v603 = vadd.f32 %v598, %v601
        %v604 = vadd.f32 %v599, %v602
        %v605 = vstv %s594
        %v606 = vmul.f32 %v605, %v380
        %v607 = vmul.f32 %v605, %v484
        %v608 = vadd.f32 %v603, %v606
        %v609 = vadd.f32 %v604, %v607
        %v610 = vstv %s595
        %v611 = vmul.f32 %v610, %v497
        %v612 = vmul.f32 %v610, %v498
        %v613 = vadd.f32 %v608, %v611
        %v614 = vadd.f32 %v609, %v612
        %v615 = vstv %s596
        %v616 = vmul.f32 %v615, %v500
        %v617 = vmul.f32 %v615, %v501
        %v618 = vadd.f32 %v613, %v616
        %v619 = vadd.f32 %v614, %v617
        %s620 = sld [smem:[#allocation9 + $0x200]]
        %s621 = sld [smem:[#allocation7 + $0x4]]
        %s622 = sld [smem:[#allocation7 + $0x84]]
        %s623 = sld [smem:[#allocation7 + $0x104]]
        %s624 = sld [smem:[#allocation7 + $0x184]]
        %s625 = sld [smem:[#allocation7 + $0x204]]
        %s626 = smul.f32 %s621, %s620
        %s627 = smul.f32 %s622, %s620
        %s628 = smul.f32 %s623, %s620
        %s629 = smul.f32 %s624, %s620
        %s630 = smul.f32 %s625, %s620
        %v631 = vstv %s626
        %v632 = vmul.f32 %v631, %v268
        %v633 = vmul.f32 %v631, %v269
        %v634 = vstv %s627
        %v635 = vmul.f32 %v634, %v271
        %v636 = vmul.f32 %v634, %v272
        %v637 = vadd.f32 %v632, %v635
        %v638 = vadd.f32 %v633, %v636
        %v639 = vstv %s628
        %v640 = vmul.f32 %v639, %v380
        %v641 = vmul.f32 %v639, %v484
        %v642 = vadd.f32 %v637, %v640
        %v643 = vadd.f32 %v638, %v641
        %v644 = vstv %s629
        %v645 = vmul.f32 %v644, %v497
        %v646 = vmul.f32 %v644, %v498
        %v647 = vadd.f32 %v642, %v645
        %v648 = vadd.f32 %v643, %v646
        %v649 = vstv %s630
        %v650 = vmul.f32 %v649, %v500
        %v651 = vmul.f32 %v649, %v501
        %v652 = vadd.f32 %v647, %v650
        %v653 = vadd.f32 %v648, %v651
        %s654 = sld [smem:[#allocation7 + $0x5]]
        %s655 = sld [smem:[#allocation7 + $0x85]]
        %s656 = sld [smem:[#allocation7 + $0x105]]
        %s657 = sld [smem:[#allocation7 + $0x185]]
        %s658 = sld [smem:[#allocation7 + $0x205]]
        %v659 = vstv %s654
        %v660 = vmul.f32 %v659, %v268
        %v661 = vmul.f32 %v659, %v269
        %v662 = vstv %s655
        %v663 = vmul.f32 %v662, %v271
        %v664 = vmul.f32 %v662, %v272
        %v665 = vadd.f32 %v660, %v663
        %v666 = vadd.f32 %v661, %v664
        %v667 = vstv %s656
        %v668 = vmul.f32 %v667, %v380
        %v669 = vmul.f32 %v667, %v484
        %v670 = vadd.f32 %v665, %v668
        %v671 = vadd.f32 %v666, %v669
        %v672 = vstv %s657
        %v673 = vmul.f32 %v672, %v497
        %v674 = vmul.f32 %v672, %v498
        %v675 = vadd.f32 %v670, %v673
        %v676 = vadd.f32 %v671, %v674
        %v677 = vstv %s658
        %v678 = vmul.f32 %v677, %v500
        %v679 = vmul.f32 %v677, %v501
        %v680 = vadd.f32 %v675, %v678
        %v681 = vadd.f32 %v676, %v679
        %v682 = vmul.f32 %v562, %v562
        %v683 = vmul.f32 %v563, %v563
        %v684 = vand.u32 2147483647, %v590
        %vm685 = vcmp.le.f32.partialorder %v684, 0.7853982
        %vm686 = vcmp.lt.s32.totalorder %v590, 0
        %v687 = vand.u32 %v590, 2139095040
        %v688 = vshrl.u32 %v687, 23
        %v689 = vsub.s32 %v688, 127
        %v690 = vand.u32 2147483647, %v590
        %v691 = vand.u32 %v690, 8388607
        %v692 = vor.u32 %v691, 8388608
        %v693 = vsub.s32 0, %v692
        %v694 = vadd.s32 %v689, 1
        %vm695 = vcmp.gt.s32.totalorder %v694, 0
        %v696 = vsel %vm695, %v694, 0
        %v697 = vshrl.u32 %v696, 5
        %v698 = vand.u32 %v696, 31
        %v699 = vsub.s32 32, %v698
        %v700 = vshrl.u32 683565275, %v699
        %v701 = vshll.u32 683565275, %v698
        %v702 = vshrl.u32 2475754826, %v699
        %v703 = vor.u32 %v701, %v702
        %v704 = vshll.u32 2475754826, %v698
        %v705 = vshrl.u32 2131351028, %v699
        %v706 = vor.u32 %v704, %v705
        %v707 = vshll.u32 2131351028, %v698
        %v708 = vshrl.u32 2102212464, %v699
        %v709 = vor.u32 %v707, %v708
        %v710 = vshll.u32 2102212464, %v698
        %v711 = vshrl.u32 920167782, %v699
        %v712 = vor.u32 %v710, %v711
        %v713 = vshll.u32 920167782, %v698
        %v714 = vshrl.u32 1326507024, %v699
        %v715 = vor.u32 %v713, %v714
        %vm716 = vcmp.lt.s32.totalorder %v697, 1
        %vm717 = vcmp.lt.s32.totalorder %v697, 2
        %vm718 = vcmp.lt.s32.totalorder %v697, 3
        %vm719 = vcmp.lt.s32.totalorder %v697, 4
        %v720 = vsel %vm716, %v700, %v703
        %v721 = vsel %vm719, %v709, 2102212464
        %v722 = vsel %vm718, %v706, %v721
        %v723 = vsel %vm717, %v720, %v722
        %v724 = vsel %vm716, %v703, %v706
        %v725 = vsel %vm719, %v712, 920167782
        %v726 = vsel %vm718, %v709, %v725
        %v727 = vsel %vm717, %v724, %v726
        %v728 = vsel %vm716, %v706, %v709
        %v729 = vsel %vm719, %v715, 1326507024
        %v730 = vsel %vm718, %v712, %v729
        %v731 = vsel %vm717, %v728, %v730
        %v732 = vshll.u32 %v692, 8
        %v733 = vmul.u32.u64.compose %v732, %v731
        %v734 = vextract.low.u32 %v733
        %v735 = vextract.high.u32 %v733
        %v736 = vmul.u32.u64.compose %v732, %v727
        %v737 = vextract.low.u32 %v736
        %v738 = vextract.high.u32 %v736
        %v739 = vmul.u32 %v732, %v723
        %v740 = vadd.s32 %v735, %v737
        %vm741 = vc.u32 %v735, %v737
        %v742 = vadd.s32 %v738, 1
        %v743 = vsel %vm741, %v742, %v738
        %v744 = vadd.s32 %v739, %v743
        %v745 = vadd.s32 %v744, 536870912
        %v746 = vshrl.u32 %v745, 30
        %v747 = vshll.u32 %v746, 30
        %v748 = vsub.s32 %v744, %v747
        %vm749 = vcmp.lt.s32.totalorder %v748, 0
        %v750 = vsub.s32 0, %v748
        %v751 = vsel %vm749, %v750, %v748
        %v752 = vclz %v751
        %v753 = vsub.s32 %v752, 2
        %vm754 = vcmp.gt.s32.totalorder 0, %v753
        %v755 = vsel %vm754, 0, %v753
        %v756 = vsub.s32 32, %v755
        %v757 = vshll.u32 %v748, %v755
        %v758 = vshrl.u32 %v740, %v756
        %v759 = vor.u32 %v757, %v758
        %v760 = vsub.s32 4294967266, %v755
        %v761 = vadd.s32 %v760, 127
        %v762 = vshll.u32 %v761, 23
        %v763 = vor.u32 4788187, %v762
        %v764 = vand.u32 2147483647, %v763
        %v766 = vcvt.s32.f32 %v759
        %v767 = vmul.f32 %v766, %v764
        %v768 = vxor.u32 %v767, 2147483648
        %v769 = vsel %vm686, %v768, %v767
        %v770 = vsub.s32 4, %v746
        %v771 = vsel %vm686, %v770, %v746
        %v772 = vsel %vm685, %v590, %v769
        %v773 = vsel %vm685, 0, %v771
        %v774 = vcosq.f32.pop %v772
        %v775 = vsinq.f32.pop %v772
        %vm776 = vweird.f32 %v590
        %v777 = vadd.s32 %v773, 3
        %v778 = vand.u32 %v777, 3
        %vm779 = vcmp.lt.s32.totalorder %v778, 2
        %vm780 = vcmp.eq.s32.totalorder %v778, 0
        %v781 = vxor.u32 %v775, 2147483648
        %v782 = vsel %vm780, %v774, %v781
        %vm783 = vcmp.eq.s32.totalorder %v778, 2
        %v784 = vxor.u32 %v774, 2147483648
        %v785 = vsel %vm783, %v784, %v775
        %v786 = vsel %vm779, %v782, %v785
        %v787 = vsel %vm776, nan, %v786
        %v788 = vand.u32 2147483647, %v591
        %vm789 = vcmp.le.f32.partialorder %v788, 0.7853982
        %vm790 = vcmp.lt.s32.totalorder %v591, 0
        %v791 = vand.u32 %v591, 2139095040
        %v792 = vshrl.u32 %v791, 23
        %v793 = vsub.s32 %v792, 127
        %v794 = vand.u32 2147483647, %v591
        %v795 = vand.u32 %v794, 8388607
        %v796 = vor.u32 %v795, 8388608
        %v797 = vsub.s32 0, %v796
        %v798 = vadd.s32 %v793, 1
        %vm799 = vcmp.gt.s32.totalorder %v798, 0
        %v800 = vsel %vm799, %v798, 0
        %v801 = vshrl.u32 %v800, 5
        %v802 = vand.u32 %v800, 31
        %v803 = vsub.s32 32, %v802
        %v804 = vshrl.u32 683565275, %v803
        %v805 = vshll.u32 683565275, %v802
        %v806 = vshrl.u32 2475754826, %v803
        %v807 = vor.u32 %v805, %v806
        %v808 = vshll.u32 2475754826, %v802
        %v809 = vshrl.u32 2131351028, %v803
        %v810 = vor.u32 %v808, %v809
        %v811 = vshll.u32 2131351028, %v802
        %v812 = vshrl.u32 2102212464, %v803
        %v813 = vor.u32 %v811, %v812
        %v814 = vshll.u32 2102212464, %v802
        %v815 = vshrl.u32 920167782, %v803
        %v816 = vor.u32 %v814, %v815
        %v817 = vshll.u32 920167782, %v802
        %v818 = vshrl.u32 1326507024, %v803
        %v819 = vor.u32 %v817, %v818
        %vm820 = vcmp.lt.s32.totalorder %v801, 1
        %vm821 = vcmp.lt.s32.totalorder %v801, 2
        %vm822 = vcmp.lt.s32.totalorder %v801, 3
        %vm823 = vcmp.lt.s32.totalorder %v801, 4
        %v824 = vsel %vm820, %v804, %v807
        %v825 = vsel %vm823, %v813, 2102212464
        %v826 = vsel %vm822, %v810, %v825
        %v827 = vsel %vm821, %v824, %v826
        %v828 = vsel %vm820, %v807, %v810
        %v829 = vsel %vm823, %v816, 920167782
        %v830 = vsel %vm822, %v813, %v829
        %v831 = vsel %vm821, %v828, %v830
        %v832 = vsel %vm820, %v810, %v813
        %v833 = vsel %vm823, %v819, 1326507024
        %v834 = vsel %vm822, %v816, %v833
        %v835 = vsel %vm821, %v832, %v834
        %v836 = vshll.u32 %v796, 8
        %v837 = vmul.u32.u64.compose %v836, %v835
        %v838 = vextract.low.u32 %v837
        %v839 = vextract.high.u32 %v837
        %v840 = vmul.u32.u64.compose %v836, %v831
        %v841 = vextract.low.u32 %v840
        %v842 = vextract.high.u32 %v840
        %v843 = vmul.u32 %v836, %v827
        %v844 = vadd.s32 %v839, %v841
        %vm845 = vc.u32 %v839, %v841
        %v846 = vadd.s32 %v842, 1
        %v847 = vsel %vm845, %v846, %v842
        %v848 = vadd.s32 %v843, %v847
        %v849 = vadd.s32 %v848, 536870912
        %v850 = vshrl.u32 %v849, 30
        %v851 = vshll.u32 %v850, 30
        %v852 = vsub.s32 %v848, %v851
        %vm853 = vcmp.lt.s32.totalorder %v852, 0
        %v854 = vsub.s32 0, %v852
        %v855 = vsel %vm853, %v854, %v852
        %v856 = vclz %v855
        %v857 = vsub.s32 %v856, 2
        %vm858 = vcmp.gt.s32.totalorder 0, %v857
        %v859 = vsel %vm858, 0, %v857
        %v860 = vsub.s32 32, %v859
        %v861 = vshll.u32 %v852, %v859
        %v862 = vshrl.u32 %v844, %v860
        %v863 = vor.u32 %v861, %v862
        %v864 = vsub.s32 4294967266, %v859
        %v865 = vadd.s32 %v864, 127
        %v866 = vshll.u32 %v865, 23
        %v867 = vor.u32 4788187, %v866
        %v868 = vand.u32 2147483647, %v867
        %v870 = vcvt.s32.f32 %v863
        %v871 = vmul.f32 %v870, %v868
        %v872 = vxor.u32 %v871, 2147483648
        %v873 = vsel %vm790, %v872, %v871
        %v874 = vsub.s32 4, %v850
        %v875 = vsel %vm790, %v874, %v850
        %v876 = vsel %vm789, %v591, %v873
        %v877 = vsel %vm789, 0, %v875
        %v878 = vcosq.f32.pop %v876
        %v879 = vsinq.f32.pop %v876
        %vm880 = vweird.f32 %v591
        %v881 = vadd.s32 %v877, 3
        %v882 = vand.u32 %v881, 3
        %vm883 = vcmp.lt.s32.totalorder %v882, 2
        %vm884 = vcmp.eq.s32.totalorder %v882, 0
        %v885 = vxor.u32 %v879, 2147483648
        %v886 = vsel %vm884, %v878, %v885
        %vm887 = vcmp.eq.s32.totalorder %v882, 2
        %v888 = vxor.u32 %v878, 2147483648
        %v889 = vsel %vm887, %v888, %v879
        %v890 = vsel %vm883, %v886, %v889
        %v891 = vsel %vm880, nan, %v890
        %v892 = vsub.f32 0.0, %v618
        %v893 = vsub.f32 0.0, %v619
        %v894 = vmul.f32 %v892, 1.442695
        %v895 = vpow.pop %v894
        %v896 = vmul.f32 %v893, 1.442695
        %v897 = vpow.pop %v896
        %v898 = vadd.f32 %v895, 1.0
        %v899 = vadd.f32 %v897, 1.0
        %v900 = vrcp.pop %v898
        %v901 = vrcp.pop %v899
        %v902 = vmul.f32 %v652, %v680
        %v903 = vmul.f32 %v653, %v681
        %v904 = vadd.f32 %v534, %v902
        %v905 = vadd.f32 %v535, %v903
        %s906 = sld [smem:[#allocation9 + $0x80]]
        %v907 = vstv %s906
        %v908 = vmul.f32 %v907, %v682
        %v909 = vmul.f32 %v907, %v683
        %v910 = vadd.f32 %v904, %v908
        %v911 = vadd.f32 %v905, %v909
        %s912 = sld [smem:[#allocation9 + $0x100]]
        %v913 = vstv %s912
        %v914 = vmul.f32 %v913, %v787
        %v915 = vmul.f32 %v913, %v891
        %v916 = vadd.f32 %v910, %v914
        %v917 = vadd.f32 %v911, %v915
        %s918 = sld [smem:[#allocation9 + $0x180]]
        %v919 = vstv %s918
        %v920 = vmul.f32 %v919, %v900
        %v921 = vmul.f32 %v919, %v901
        %v922 = vadd.f32 %v916, %v920
        %v923 = vadd.f32 %v917, %v921
        %924 = vst [vmem:[%s254] sm:$0xff] %v922
        %925 = vst [vmem:[%s254 + $0x8] sm:$0xff] %v923
        %s926 = sand.u32 %s120, 1
        %s927 = scalar_lea.sflag [#allocation4], %s926
        %s928 = sand.u32 %s120, 1
        %s929 = smul.addr %s928, 16
        %s930 = scalar_lea.vmem [#allocation10], %s929
        // Predicated region
        $region53: #{symbolic_net_forward.1} parent=35 // pred_check
          %p931 = pneg %p130
        $region54: #{symbolic_net_forward.1} parent=35 // pred_check_branch
          %933 = sbr.rel (%p931) target = $region56
        $region55: #{symbolic_net_forward.1} parent=35 // pred_region
          %s934 = smul.u32 2, %s23
          %s936 = ssub.s32 256, 256
          %937 = vsyncadd %s927, %s936
          %s938 = smul.addr %s934, 128
          %s939 = scalar_lea.hbm %s4, %s938
          %s940 = sshll.u32 %s930, 4
          %s941 = int_to_ptr.vmem [resolvable:$true] %s940
          %946 = dma.vmem_to_hbm [thread:$0]  %s941, 256, %s939, %s927, 128, 128, 8
        $region56: #{symbolic_net_forward.1} parent=35 // pred_fallthru
          _
      $region36: #{symbolic_net_forward.1} parent=5 // pred_fallthru
        _
      %p947 = scmp.le.s32.totalorder 2, %s18
      // Predicated region
      $region57: #{symbolic_net_forward.1} parent=5 // pred_check
        %p948 = pneg %p947
      $region58: #{symbolic_net_forward.1} parent=5 // pred_check_branch
        %950 = sbr.rel (%p948) target = $region60
      $region59: #{symbolic_net_forward.1} parent=5 // pred_region
        %s951 = ssub.s32 %s18, 2
        // Predicated region
        $region61: #{symbolic_net_forward.1} parent=59 // pred_check
          %p952 = pneg %p136
        $region62: #{symbolic_net_forward.1} parent=59 // pred_check_branch
          %954 = sbr.rel (%p952) target = $region64
        $region63: #{symbolic_net_forward.1} parent=59 // pred_region
          %s955 = sand.u32 %s121, 1
          %s956 = scalar_lea.sflag [#allocation4], %s955
          %s957 = sand.u32 %s121, 1
          %s958 = smul.addr %s957, 16
          %s959 = scalar_lea.vmem [#allocation10], %s958
          %960 = dma.done %s956, 256
        $region64: #{symbolic_net_forward.1} parent=59 // pred_fallthru
          _
      $region60: #{symbolic_net_forward.1} parent=5 // pred_fallthru
        _
    $region6: #{symbolic_net_forward.1} parent=1 // loop_footer
      %s22 = sadd.s32 1, %s18
    $region7: #{symbolic_net_forward.1} parent=1 // loop_footer_branch
      %17 = sbr.rel target = $region3
    $region8: #{symbolic_net_forward.1} parent=1 // loop_exit
      _
    %961 = vsyncpa [#allocation3], 1
    %s962 = scalar_lea.sflag [#allocation3], 1
    %963 = vsyncpa %s962, 1
    %964 = vsyncpa [#allocation4], 1
    %s965 = scalar_lea.sflag [#allocation4], 1
    %966 = vsyncpa %s965, 1
    %967 = vsyncpa [#allocation5], 1
    %s968 = scalar_lea.sflag [#allocation5], 1
    %969 = vsyncpa %s968, 1
    %970 = vsyncpa [#allocation8], 1

</llo_original>
